<compile_context>
chip_gen: v6e
topology: v6e:2x2x1
jax: 0.10.0
libtpu: 0.0.40
codegen_flags: <defaults>
</compile_context>

<pallas_src>
import functools

import jax
import jax.numpy as jnp
import numpy as np
from jax import lax
from jax.experimental import pallas as pl
from jax.experimental.pallas import tpu as pltpu


# ---------------------------------------------------------------------------
# shared in-kernel mask math
# ---------------------------------------------------------------------------
def _mask_from_abs_sum(absum_kv, u, a, fold, *, gamma, numel, k):
    """(N, kV) per-lane sum|x|  ->  (N, kV) scaled keep-mask (f32).

    Mirrors the PyTorch module; the 1/(C*T) mean factor cancels in the
    normalisation so raw sums are used.  fold[g*V + j, j] = 1 folds / re-tiles
    the k packed lane groups with tiny MXU matmuls (no unaligned lane slices).
    """
    if k > 1:
        absum = jnp.dot(absum_kv, fold, preferred_element_type=jnp.float32)  # (N, V)
    else:
        absum = absum_kv
    total = jnp.sum(absum, keepdims=True)                                    # (1, 1)
    p = jnp.minimum(absum * (float(numel) * gamma) / total, 1.0)
    m_seed = (u < p).astype(jnp.float32)                                     # Bernoulli(p)
    m = jnp.dot(m_seed, a, preferred_element_type=jnp.float32)
    # M[M > 0.001] = 1; M[M < 0.5] = 0   ==   binarize at 0.001.
    keep = 1.0 - (m > 0.001).astype(jnp.float32)
    keep_sum = jnp.sum(keep, keepdims=True)                                  # (1, 1)
    # Like PyTorch, the everything-dropped case yields inf/NaN (no clamp).
    scaled = keep * (float(numel) / keep_sum)                                # (N, V)
    if k > 1:
        # broadcast node mask back onto the packed lane layout: (N, V) -> (N, kV)
        scaled = lax.dot_general(scaled, fold, (((1,), (1,)), ((), ())),
                                 preferred_element_type=jnp.float32)
    return scaled


# ---------------------------------------------------------------------------
# kernels
# ---------------------------------------------------------------------------
def _abs_sum_kernel(x_ref, acc_ref, *, rp, block_rows, shard_tiles, needs_row_mask):
    """Accumulates per-(n, lane) sum|x| over this shard's row tiles."""
    s = pl.program_id(0)
    i = pl.program_id(1)

    @pl.when(i == 0)
    def _init():
        acc_ref[...] = jnp.zeros_like(acc_ref)

    ax = jnp.abs(x_ref[...])                                    # (N, tr, kV), x dtype
    if needs_row_mask:
        # Padded / duplicated trailing blocks: zero rows past the real extent.
        b = s * shard_tiles + i                                 # logical row-block
        row0 = b * block_rows
        rows = lax.broadcasted_iota(jnp.int32, (1, block_rows, 1), 1)
        ax = jnp.where(rows < (rp - row0), ax, 0)
    acc_ref[...] += jnp.sum(ax, axis=1, dtype=jnp.float32)      # f32 accumulation


def _finalize_mask_kernel(part_ref, u_ref, a_ref, fold_ref, mask_ref, *,
                          gamma, numel, k):
    absum_kv = jnp.sum(part_ref[...], axis=0)                   # combine shards
    mask_ref[...] = _mask_from_abs_sum(absum_kv, u_ref[...], a_ref[...],
                                       fold_ref[...], gamma=gamma,
                                       numel=numel, k=k)


def _apply_mask_kernel(mask_ref, x_ref, o_ref):
    # mask_ref: (N, 1, kV) resident; x_ref / o_ref: (N, tr, kV) streamed tiles.
    o_ref[...] = (x_ref[...] * mask_ref[...]).astype(o_ref.dtype)


def _fused_kernel(u_ref, a_ref, fold_ref, x_ref, o_ref, *, gamma, numel, k):
    # x fully VMEM-resident: reduce, build mask and apply in one HBM round trip.
    x = x_ref[...]
    absum_kv = jnp.sum(jnp.abs(x), axis=1, dtype=jnp.float32)   # (N, kV)
    mask = _mask_from_abs_sum(absum_kv, u_ref[...], a_ref[...], fold_ref[...],
                              gamma=gamma, numel=numel, k=k)
    o_ref[...] = (x * mask[:, None, :]).astype(o_ref.dtype)


# ---------------------------------------------------------------------------
# sizing helpers (per-generation VMEM budgets)
# ---------------------------------------------------------------------------
def _vmem_budget():
    """(vmem_limit, reduce_tile_bytes, apply_tile_bytes, max_fused_x_bytes)."""
    try:
        cap = int(pltpu.get_tpu_info().vmem_capacity_bytes)
    except Exception:                 # unknown chip: assume v7x's 64 MiB (safe)
        cap = 64 * 1024 * 1024
    limit = (cap // 4) * 3            # leave headroom for compiler scratch
    reduce_tile = min(16 * 1024 * 1024, limit // 3)  # one double-buffered stream
    apply_tile = min(6 * 1024 * 1024, limit // 8)    # in + out, double-buffered
    max_fused = limit // 5            # x in + out (+ buffers) fully resident
    return limit, reduce_tile, apply_tile, max_fused


def _pick_block_rows(rp, row_bytes, target_bytes):
    if rp <= 8:
        return rp
    rows = max(8, (target_bytes // max(row_bytes, 1)) // 8 * 8)
    return min(rows, rp)


# ---------------------------------------------------------------------------
# wrapper
# ---------------------------------------------------------------------------
def drop_graph_spatial(x, keep_prob, A, *, drop_size, key=None, uniform=None,
                       training=True, donate_x=False, max_fused_bytes=None,
                       reduce_block_rows=None, apply_block_rows=None):
    """JAX/Pallas equivalent of DropGraphSpatial.forward.

    x: (N, C, T, V); A: (V, V); keep_prob / drop_size: python scalars.
    Pass a fresh `key` (or explicit `uniform` of shape (N, V)) per step.
    donate_x=True aliases x's buffer to the output (only if the caller no
    longer needs x).  *_block_rows / max_fused_bytes are testing/tuning knobs.
    """
    if (not training) or keep_prob == 1:
        return x

    n, c, t, v = x.shape
    r = c * t
    numel = n * v
    gamma = (1.0 - float(keep_prob)) / (1.0 + float(drop_size))

    if uniform is None:
        if key is None:
            key = jax.random.PRNGKey(0)
        uniform = jax.random.uniform(key, (n, v), dtype=jnp.float32)
    u = uniform.astype(jnp.float32)
    a32 = A.astype(jnp.float32)

    # Lane packing: fold k consecutive (c, t) rows into the lane axis so the
    # VPU sees up to 128 useful lanes even for small V (contiguous reshapes only).
    k = 1
    if v < 128:
        k = max(1, 128 // v)
        while k > 1 and r % k:
            k -= 1
    kv = k * v
    rp = r // k
    xp = x.reshape(n, rp, kv)

    # Constant fold/tile matrix: fold[g*V + j, j] = 1.
    fold = (jnp.arange(kv, dtype=jnp.int32)[:, None] % v
            == jnp.arange(v, dtype=jnp.int32)[None, :]).astype(jnp.float32)

    elem = xp.dtype.itemsize
    x_bytes = xp.size * elem
    vmem_limit, reduce_tile_b, apply_tile_b, fused_max = _vmem_budget()
    if max_fused_bytes is not None:
        fused_max = max_fused_bytes

    out_shape = jax.ShapeDtypeStruct((n, rp, kv), xp.dtype)

    # ---- small/medium x: single fused pass, x VMEM-resident ------------------
    if x_bytes <= fused_max:
        y = pl.pallas_call(
            functools.partial(_fused_kernel, gamma=gamma, numel=numel, k=k),
            out_shape=out_shape,
            grid=(1,),
            in_specs=[pl.BlockSpec((n, v), lambda i: (0, 0)),
                      pl.BlockSpec((v, v), lambda i: (0, 0)),
                      pl.BlockSpec((kv, v), lambda i: (0, 0)),
                      pl.BlockSpec((n, rp, kv), lambda i: (0, 0, 0))],
            out_specs=pl.BlockSpec((n, rp, kv), lambda i: (0, 0, 0)),
            compiler_params=pltpu.CompilerParams(vmem_limit_bytes=vmem_limit),
            cost_estimate=pl.CostEstimate(flops=3 * xp.size, transcendentals=0,
                                          bytes_accessed=2 * x_bytes),
            input_output_aliases=({3: 0} if donate_x else {}),
        )(u, a32, fold, xp)
        return y.reshape(n, c, t, v)

    # ---- large x: reduce -> tiny finalize -> apply ----------------------------
    row_bytes = n * kv * elem

    # Pass 1: per-shard abs-sum partials.  Two shards let v7x's two TensorCores
    # split this pass; on single-core chips the extra shard is free.
    tr_red = (min(rp, reduce_block_rows) if reduce_block_rows
              else _pick_block_rows(rp, row_bytes, reduce_tile_b))
    nb_red = -(-rp // tr_red)
    shards = 2 if nb_red >= 2 else 1
    tps = -(-nb_red // shards)
    needs_row_mask = (rp % tr_red != 0) or (shards * tps != nb_red)
    last_block = nb_red - 1

    partials = pl.pallas_call(
        functools.partial(_abs_sum_kernel, rp=rp, block_rows=tr_red,
                          shard_tiles=tps, needs_row_mask=needs_row_mask),
        out_shape=jax.ShapeDtypeStruct((shards, n, kv), jnp.float32),
        grid=(shards, tps),
        in_specs=[pl.BlockSpec(
            (n, tr_red, kv),
            lambda s, i: (0, jnp.minimum(s * tps + i, last_block), 0))],
        out_specs=pl.BlockSpec((None, n, kv), lambda s, i: (s, 0, 0)),
        compiler_params=pltpu.CompilerParams(
            dimension_semantics=("parallel", "arbitrary"),
            vmem_limit_bytes=vmem_limit),
        cost_estimate=pl.CostEstimate(flops=2 * xp.size, transcendentals=0,
                                      bytes_accessed=x_bytes),
    )(xp)

    # Pass 2: O(N*V^2) finalize -- negligible.
    mask_kv = pl.pallas_call(
        functools.partial(_finalize_mask_kernel, gamma=gamma, numel=numel, k=k),
        out_shape=jax.ShapeDtypeStruct((n, kv), jnp.float32),
        grid=(1,),
        in_specs=[pl.BlockSpec((shards, n, kv), lambda i: (0, 0, 0)),
                  pl.BlockSpec((n, v), lambda i: (0, 0)),
                  pl.BlockSpec((v, v), lambda i: (0, 0)),
                  pl.BlockSpec((kv, v), lambda i: (0, 0))],
        out_specs=pl.BlockSpec((n, kv), lambda i: (0, 0)),
        compiler_params=pltpu.CompilerParams(vmem_limit_bytes=vmem_limit),
    )(partials, u, a32, fold)

    # Pass 3: stream x once more and apply the broadcast mask.
    tr_app = (min(rp, apply_block_rows) if apply_block_rows
              else _pick_block_rows(rp, row_bytes, apply_tile_b))
    nb_app = -(-rp // tr_app)

    y = pl.pallas_call(
        _apply_mask_kernel,
        out_shape=out_shape,
        grid=(nb_app,),
        in_specs=[pl.BlockSpec((n, 1, kv), lambda i: (0, 0, 0)),
                  pl.BlockSpec((n, tr_app, kv), lambda i: (0, i, 0))],
        out_specs=pl.BlockSpec((n, tr_app, kv), lambda i: (0, i, 0)),
        compiler_params=pltpu.CompilerParams(
            dimension_semantics=("parallel",),
            vmem_limit_bytes=vmem_limit),
        cost_estimate=pl.CostEstimate(flops=xp.size, transcendentals=0,
                                      bytes_accessed=2 * x_bytes),
        input_output_aliases=({1: 0} if donate_x else {}),
    )(mask_kv.reshape(n, 1, kv), xp)

    return y.reshape(n, c, t, v)


# ---------------------------------------------------------------------------
# literal JAX reference (mirrors the PyTorch module) for verification
# ---------------------------------------------------------------------------
def drop_graph_spatial_reference(x, keep_prob, A, drop_size, uniform):
    n, c, t, v = x.shape
    input_abs = jnp.mean(jnp.mean(jnp.abs(x), axis=2), axis=1)
    input_abs = input_abs / jnp.sum(input_abs) * input_abs.size
    gamma = (1.0 - keep_prob) / (1.0 + drop_size)
    m_seed = (uniform < jnp.minimum(input_abs * gamma, 1.0)).astype(x.dtype)
    m = jnp.matmul(m_seed, A.astype(x.dtype))
    m = jnp.where(m > 0.001, 1.0, m)
    m = jnp.where(m < 0.5, 0.0, m)
    mask = (1.0 - m).reshape(n, 1, 1, v)
    return x * mask * mask.size / jnp.sum(mask)


if __name__ == "__main__":
    root = jax.random.PRNGKey(0)
    kx1, ku1, kx2, ku2 = jax.random.split(root, 4)

    def path_graph(v):
        idx = jnp.arange(v)
        adj = (jnp.abs(idx[:, None] - idx[None, :]) <= 1).astype(jnp.float32)
        return adj / jnp.sum(adj, axis=1, keepdims=True)

    def check(x, keep_prob, A, drop_size, u, **kw):
        out = drop_graph_spatial(x, keep_prob, A, drop_size=drop_size,
                                 uniform=u, **kw)
        out = jax.block_until_ready(out)
        ref = drop_graph_spatial_reference(x, keep_prob, A, drop_size, u)
        assert out.shape == x.shape and out.dtype == x.dtype
        assert np.allclose(np.asarray(out), np.asarray(ref),
                           rtol=1e-5, atol=1e-5, equal_nan=True), \
            f"max abs err {np.max(np.abs(np.asarray(out) - np.asarray(ref)))}"

    # 1) small input -> fused single-pass VMEM-resident path.
    n, c, t, v = 2, 4, 16, 16
    x1 = jax.random.normal(kx1, (n, c, t, v), dtype=jnp.float32)
    u1 = jax.random.uniform(ku1, (n, v), dtype=jnp.float32)
    check(x1, 0.9, path_graph(v), 1, u1)

    # 2) tiled 3-pass path, forced, with partial blocks (V=25 -> 125-lane pack,
    #    30 packed rows tiled by 8 -> sharded reduce + masked tail block).
    n, c, t, v = 2, 3, 50, 25
    x2 = jax.random.normal(kx2, (n, c, t, v), dtype=jnp.float32)
    u2 = jax.random.uniform(ku2, (n, v), dtype=jnp.float32)
    A2 = path_graph(v)
    check(x2, 0.9, A2, 1, u2, max_fused_bytes=0,
          reduce_block_rows=8, apply_block_rows=8)

    # 3) tiled path with auto tile sizes (single full-extent block).
    check(x2, 0.9, A2, 1, u2, max_fused_bytes=0)

    print("KERNEL_OK")
</pallas_src>

<mosaic_0001>
module attributes {stable_mosaic.version = 11 : i64} {
  func.func @_fused_kernel(%arg0: i32, %arg1: memref<2x16xf32, #tpu.memory_space<vmem>>, %arg2: memref<16x16xf32, #tpu.memory_space<vmem>>, %arg3: memref<128x16xf32, #tpu.memory_space<vmem>>, %arg4: memref<2x8x128xf32, #tpu.memory_space<vmem>>, %arg5: memref<2x8x128xf32, #tpu.memory_space<vmem>>) attributes {dimension_semantics = [#tpu.dimension_semantics<arbitrary>], iteration_bounds = array<i64: 1>, scalar_prefetch = 0 : i64, scratch_operands = 0 : i64, tpu.core_type = #tpu.core_type<tc>, window_params = [{pipeline_mode = #tpu.pipeline_mode<synchronous>, transform_indices = @transform_0, window_bounds = array<i64: 2, 16>}, {pipeline_mode = #tpu.pipeline_mode<synchronous>, transform_indices = @transform_1, window_bounds = array<i64: 16, 16>}, {pipeline_mode = #tpu.pipeline_mode<synchronous>, transform_indices = @transform_2, window_bounds = array<i64: 128, 16>}, {pipeline_mode = #tpu.pipeline_mode<synchronous>, transform_indices = @transform_3, window_bounds = array<i64: 2, 8, 128>}, {pipeline_mode = #tpu.pipeline_mode<synchronous>, transform_indices = @transform_4, window_bounds = array<i64: 2, 8, 128>}]} {
    %c0 = arith.constant 0 : index
    %c0_0 = arith.constant 0 : index
    %c0_1 = arith.constant 0 : index
    %0 = vector.load %arg4[%c0, %c0_0, %c0_1] : memref<2x8x128xf32, #tpu.memory_space<vmem>>, vector<2x8x128xf32>
    %1 = math.absf %0 : vector<2x8x128xf32>
    %cst = arith.constant dense<0.000000e+00> : vector<2x128xf32>
    %2 = vector.multi_reduction <add>, %1, %cst [1] : vector<2x8x128xf32> to vector<2x128xf32>
    %c0_2 = arith.constant 0 : index
    %c0_3 = arith.constant 0 : index
    %3 = vector.load %arg1[%c0_2, %c0_3] : memref<2x16xf32, #tpu.memory_space<vmem>>, vector<2x16xf32>
    %c0_4 = arith.constant 0 : index
    %c0_5 = arith.constant 0 : index
    %4 = vector.load %arg2[%c0_4, %c0_5] : memref<16x16xf32, #tpu.memory_space<vmem>>, vector<16x16xf32>
    %c0_6 = arith.constant 0 : index
    %c0_7 = arith.constant 0 : index
    %5 = vector.load %arg3[%c0_6, %c0_7] : memref<128x16xf32, #tpu.memory_space<vmem>>, vector<128x16xf32>
    %cst_8 = arith.constant dense<0.000000e+00> : vector<2x16xf32>
    %6 = tpu.matmul %2, %5, %cst_8 {dimension_numbers = #tpu.dot_dimension_numbers<[1], [0], [0], [1], [0, 0, 1, 1], [], []>} : vector<2x128xf32>, vector<128x16xf32>, vector<2x16xf32> -> vector<2x16xf32>
    %7 = vector.shape_cast %6 : vector<2x16xf32> to vector<1x2x16xf32>
    %cst_9 = arith.constant dense<0.000000e+00> : vector<1xf32>
    %8 = vector.multi_reduction <add>, %7, %cst_9 [1, 2] : vector<1x2x16xf32> to vector<1xf32>
    %9 = vector.shape_cast %8 : vector<1xf32> to vector<1x1x1xf32>
    %10 = vector.extract %9[0, 0, 0] : f32 from vector<1x1x1xf32>
    %11 = vector.broadcast %10 : f32 to vector<1x1xf32>
    %cst_10 = arith.constant 1.600000e+00 : f32
    %12 = vector.broadcast %cst_10 : f32 to vector<2x16xf32>
    %13 = arith.mulf %6, %12 : vector<2x16xf32>
    %14 = vector.broadcast %11 : vector<1x1xf32> to vector<2x16xf32>
    %15 = arith.divf %13, %14 : vector<2x16xf32>
    %cst_11 = arith.constant 1.000000e+00 : f32
    %16 = vector.broadcast %cst_11 : f32 to vector<2x16xf32>
    %17 = arith.minimumf %15, %16 : vector<2x16xf32>
    %18 = arith.cmpf olt, %3, %17 : vector<2x16xf32>
    %19 = arith.extui %18 : vector<2x16xi1> to vector<2x16xi32>
    %20 = arith.sitofp %19 : vector<2x16xi32> to vector<2x16xf32>
    %cst_12 = arith.constant dense<0.000000e+00> : vector<2x16xf32>
    %21 = tpu.matmul %20, %4, %cst_12 {dimension_numbers = #tpu.dot_dimension_numbers<[1], [0], [0], [1], [0, 0, 1, 1], [], []>} : vector<2x16xf32>, vector<16x16xf32>, vector<2x16xf32> -> vector<2x16xf32>
    %cst_13 = arith.constant 1.000000e-03 : f32
    %22 = vector.broadcast %cst_13 : f32 to vector<2x16xf32>
    %23 = arith.cmpf ogt, %21, %22 : vector<2x16xf32>
    %24 = arith.extui %23 : vector<2x16xi1> to vector<2x16xi32>
    %25 = arith.sitofp %24 : vector<2x16xi32> to vector<2x16xf32>
    %cst_14 = arith.constant 1.000000e+00 : f32
    %26 = vector.broadcast %cst_14 : f32 to vector<2x16xf32>
    %27 = arith.subf %26, %25 : vector<2x16xf32>
    %28 = vector.shape_cast %27 : vector<2x16xf32> to vector<1x2x16xf32>
    %cst_15 = arith.constant dense<0.000000e+00> : vector<1xf32>
    %29 = vector.multi_reduction <add>, %28, %cst_15 [1, 2] : vector<1x2x16xf32> to vector<1xf32>
    %30 = vector.shape_cast %29 : vector<1xf32> to vector<1x1x1xf32>
    %31 = vector.extract %30[0, 0, 0] : f32 from vector<1x1x1xf32>
    %32 = vector.broadcast %31 : f32 to vector<1x1xf32>
    %cst_16 = arith.constant 3.200000e+01 : f32
    %33 = vector.broadcast %cst_16 : f32 to vector<1x1xf32>
    %34 = arith.divf %33, %32 : vector<1x1xf32>
    %35 = vector.broadcast %34 : vector<1x1xf32> to vector<2x16xf32>
    %36 = arith.mulf %27, %35 : vector<2x16xf32>
    %cst_17 = arith.constant dense<0.000000e+00> : vector<2x128xf32>
    %37 = tpu.matmul %36, %5, %cst_17 {dimension_numbers = #tpu.dot_dimension_numbers<[1], [1], [0], [0], [0, 0, 1, 0], [], []>} : vector<2x16xf32>, vector<128x16xf32>, vector<2x128xf32> -> vector<2x128xf32>
    %38 = vector.shape_cast %37 : vector<2x128xf32> to vector<2x1x128xf32>
    %39 = vector.broadcast %38 : vector<2x1x128xf32> to vector<2x8x128xf32>
    %40 = arith.mulf %0, %39 : vector<2x8x128xf32>
    %c0_18 = arith.constant 0 : index
    %c0_19 = arith.constant 0 : index
    %c0_20 = arith.constant 0 : index
    %41 = vector.load %arg5[%c0_18, %c0_19, %c0_20] : memref<2x8x128xf32, #tpu.memory_space<vmem>>, vector<2x8x128xf32>
    tpu.vector_store %arg5[%c0_18, %c0_19, %c0_20], %40 {strides = array<i32>} : memref<2x8x128xf32, #tpu.memory_space<vmem>>, vector<2x8x128xf32>,
    return
  }
  func.func @transform_0(%arg0: i32) -> (i32, i32) {
    %c0_i32 = arith.constant 0 : i32
    %c0_i32_0 = arith.constant 0 : i32
    %c0_i32_1 = arith.constant 0 : i32
    return %c0_i32, %c0_i32_0 : i32, i32
  }
  func.func @transform_1(%arg0: i32) -> (i32, i32) {
    %c0_i32 = arith.constant 0 : i32
    %c0_i32_0 = arith.constant 0 : i32
    %c0_i32_1 = arith.constant 0 : i32
    return %c0_i32, %c0_i32_0 : i32, i32
  }
  func.func @transform_2(%arg0: i32) -> (i32, i32) {
    %c0_i32 = arith.constant 0 : i32
    %c0_i32_0 = arith.constant 0 : i32
    %c0_i32_1 = arith.constant 0 : i32
    return %c0_i32, %c0_i32_0 : i32, i32
  }
  func.func @transform_3(%arg0: i32) -> (i32, i32, i32) {
    %c0_i32 = arith.constant 0 : i32
    %c0_i32_0 = arith.constant 0 : i32
    %c0_i32_1 = arith.constant 0 : i32
    %c0_i32_2 = arith.constant 0 : i32
    return %c0_i32, %c0_i32_0, %c0_i32_1 : i32, i32, i32
  }
  func.func @transform_4(%arg0: i32) -> (i32, i32, i32) {
    %c0_i32 = arith.constant 0 : i32
    %c0_i32_0 = arith.constant 0 : i32
    %c0_i32_1 = arith.constant 0 : i32
    %c0_i32_2 = arith.constant 0 : i32
    return %c0_i32, %c0_i32_0, %c0_i32_1 : i32, i32, i32
  }
}

</mosaic_0001>

<llo_original>
// kernel: tpu_custom_call.1
$region0: #{tpu_custom_call.1}
  #allocation0 [shape = 'u32[]', space=smem, size = 0x4, offset = 0x4, fixed_abs, tag = 'smem constant byte address 0x4 - core index']
  #allocation1 [shape = 'u32[144,128]{1,0:T(1,128)}', space=vmem, size = 0x12000, scoped, tag = 'internal scratch']
  %s0 = inlined_call_operand.vmem [shape: f32[2,16], index: 0, kind: input, shape index: {}]
  %s1 = inlined_call_operand.vmem [shape: f32[16,16], index: 1, kind: input, shape index: {}]
  %s2 = inlined_call_operand.vmem [shape: f32[128,16], index: 2, kind: input, shape index: {}]
  %s3 = inlined_call_operand.vmem [shape: f32[2,8,128], index: 3, kind: input, shape index: {}]
  %s4 = inlined_call_operand.hbm [shape: f32[2,8,128], index: 4, kind: output, shape index: {}]
  %s5 = sld [smem:[#allocation0]]
  $region26: #{tpu_custom_call.1} parent=0
    _
  %s7 = ssub.s32 1, %s5
  %s8 = scalar_select 0, %s7, %s5
  $region1: #{tpu_custom_call.1} parent=0
    #allocation2 [shape = 'u8[8192]{0}', space=vmem, size = 0x2000, scoped, tag = 'output window, operand 0, single buffered']
    #allocation3 [shape = 's32[1]{0}', space=sflag, size = 0x4, scoped, tag = 'scoped memory for tpu_custom_call.1']
    %9 = vsyncpa [#allocation3], 0
    // Predicated region
    $region2: #{tpu_custom_call.1} parent=1 // pred_check
      _
    $region3: #{tpu_custom_call.1} parent=1 // pred_check_branch
      %11 = sbr.rel (0) target = $region5
    $region4: #{tpu_custom_call.1} parent=1 // pred_region
      _
    $region5: #{tpu_custom_call.1} parent=1 // pred_fallthru
      _
    // Predicated region
    $region6: #{tpu_custom_call.1} parent=1 // pred_check
      _
    $region7: #{tpu_custom_call.1} parent=1 // pred_check_branch
      %13 = sbr.rel (0) target = $region9
    $region8: #{tpu_custom_call.1} parent=1 // pred_region
      _
    $region9: #{tpu_custom_call.1} parent=1 // pred_fallthru
      _
    // Predicated region
    $region10: #{tpu_custom_call.1} parent=1 // pred_check
      _
    $region11: #{tpu_custom_call.1} parent=1 // pred_check_branch
      %15 = sbr.rel (0) target = $region13
    $region12: #{tpu_custom_call.1} parent=1 // pred_region
      _
    $region13: #{tpu_custom_call.1} parent=1 // pred_fallthru
      _
    // Predicated region
    $region14: #{tpu_custom_call.1} parent=1 // pred_check
      _
    $region15: #{tpu_custom_call.1} parent=1 // pred_check_branch
      %17 = sbr.rel (0) target = $region17
    $region16: #{tpu_custom_call.1} parent=1 // pred_region
      _
    $region17: #{tpu_custom_call.1} parent=1 // pred_fallthru
      _
    %v18 = vld [vmem:[%s3] sm:$0xff]
    %v19 = vld [vmem:[%s3 + $0x8] sm:$0xff]
    %v20 = vand.u32 2147483647, %v18
    %v21 = vand.u32 2147483647, %v19
    %v22 = vrot.slane %v20, 4
    %v23 = vadd.f32 %v20, %v22
    %v24 = vrot.slane %v23, 2
    %v25 = vadd.f32 %v23, %v24
    %v26 = vrot.slane %v25, 1
    %v27 = vadd.f32 %v25, %v26
    %v28 = vrot.slane %v21, 4
    %v29 = vadd.f32 %v21, %v28
    %v30 = vrot.slane %v29, 2
    %v31 = vadd.f32 %v29, %v30
    %v32 = vrot.slane %v31, 1
    %v33 = vadd.f32 %v31, %v32
    %v34 = vld [vmem:[%s0] sm:$0x3]
    %v35 = vld [vmem:[%s1] sm:$0xff]
    %v36 = vld [vmem:[%s1 + $0x8] sm:$0xff]
    %v37 = vld [vmem:[%s2] sm:$0xff]
    %v38 = vld [vmem:[%s2 + $0x8] sm:$0xff]
    %v39 = vld [vmem:[%s2 + $0x10] sm:$0xff]
    %v40 = vld [vmem:[%s2 + $0x18] sm:$0xff]
    %v41 = vld [vmem:[%s2 + $0x20] sm:$0xff]
    %v42 = vld [vmem:[%s2 + $0x28] sm:$0xff]
    %v43 = vld [vmem:[%s2 + $0x30] sm:$0xff]
    %v44 = vld [vmem:[%s2 + $0x38] sm:$0xff]
    %v45 = vld [vmem:[%s2 + $0x40] sm:$0xff]
    %v46 = vld [vmem:[%s2 + $0x48] sm:$0xff]
    %v47 = vld [vmem:[%s2 + $0x50] sm:$0xff]
    %v48 = vld [vmem:[%s2 + $0x58] sm:$0xff]
    %v49 = vld [vmem:[%s2 + $0x60] sm:$0xff]
    %v50 = vld [vmem:[%s2 + $0x68] sm:$0xff]
    %v51 = vld [vmem:[%s2 + $0x70] sm:$0xff]
    %v52 = vld [vmem:[%s2 + $0x78] sm:$0xff]
    %vm55 = vcmask 1041409
    %v56 = vsel %vm55, %v33, %v27
    %58 = vmatprep.subr.mxu0 0.0
    %59 = vmatpush1.msra.mxu0 %v52
    %60 = vmatprep.subr.mxu0 0.0
    %61 = vmatpush1.msra.mxu0 %v51
    %62 = vmatprep.subr.mxu0 0.0
    %63 = vmatpush1.msra.mxu0 %v50
    %64 = vmatprep.subr.mxu0 0.0
    %65 = vmatpush1.msra.mxu0 %v49
    %66 = vmatprep.subr.mxu0 0.0
    %67 = vmatpush1.msra.mxu0 %v48
    %68 = vmatprep.subr.mxu0 0.0
    %69 = vmatpush1.msra.mxu0 %v47
    %70 = vmatprep.subr.mxu0 0.0
    %71 = vmatpush1.msra.mxu0 %v46
    %72 = vmatprep.subr.mxu0 0.0
    %73 = vmatpush1.msra.mxu0 %v45
    %74 = vmatprep.subr.mxu0 0.0
    %75 = vmatpush1.msra.mxu0 %v44
    %76 = vmatprep.subr.mxu0 0.0
    %77 = vmatpush1.msra.mxu0 %v43
    %78 = vmatprep.subr.mxu0 0.0
    %79 = vmatpush1.msra.mxu0 %v42
    %80 = vmatprep.subr.mxu0 0.0
    %81 = vmatpush1.msra.mxu0 %v41
    %82 = vmatprep.subr.mxu0 0.0
    %83 = vmatpush1.msra.mxu0 %v40
    %84 = vmatprep.subr.mxu0 0.0
    %85 = vmatpush1.msra.mxu0 %v39
    %86 = vmatprep.subr.mxu0 0.0
    %87 = vmatpush1.msra.mxu0 %v38
    %88 = vmatprep.subr.mxu0 0.0
    %89 = vmatpush1.msra.mxu0 %v37
    %90 = vmatprep.subr.mxu0 0.0
    %91 = vmatpush2.msra.mxu0 0.0
    %92 = vmatprep.subr.mxu0 0.0
    %93 = vmatpush2.msra.mxu0 0.0
    %94 = vmatprep.subr.mxu0 0.0
    %95 = vmatpush2.msra.mxu0 0.0
    %96 = vmatprep.subr.mxu0 0.0
    %97 = vmatpush2.msra.mxu0 0.0
    %98 = vmatprep.subr.mxu0 0.0
    %99 = vmatpush2.msra.mxu0 0.0
    %100 = vmatprep.subr.mxu0 0.0
    %101 = vmatpush2.msra.mxu0 0.0
    %102 = vmatprep.subr.mxu0 0.0
    %103 = vmatpush2.msra.mxu0 0.0
    %104 = vmatprep.subr.mxu0 0.0
    %105 = vmatpush2.msra.mxu0 0.0
    %106 = vmatprep.subr.mxu0 0.0
    %107 = vmatpush2.msra.mxu0 0.0
    %108 = vmatprep.subr.mxu0 0.0
    %109 = vmatpush2.msra.mxu0 0.0
    %110 = vmatprep.subr.mxu0 0.0
    %111 = vmatpush2.msra.mxu0 0.0
    %112 = vmatprep.subr.mxu0 0.0
    %113 = vmatpush2.msra.mxu0 0.0
    %114 = vmatprep.subr.mxu0 0.0
    %115 = vmatpush2.msra.mxu0 0.0
    %116 = vmatprep.subr.mxu0 0.0
    %117 = vmatpush2.msra.mxu0 0.0
    %118 = vmatprep.subr.mxu0 0.0
    %119 = vmatpush2.msra.mxu0 0.0
    %120 = vmatprep.subr.mxu0 0.0
    %121 = vmatpush2.msra.mxu0 0.0
    %122 = vmatprep.mubr.f32.mxu0 0.0
    %123 = vmatmul.mubr.f32.gmra.mxu0 %v56
    %v124 = vpop.f32.mrf.mxu0
    %v125 = vadd.f32 0.0, %v124
    %v126 = vpop.f32.mrf.mxu0
    %127 = vdwg.mxu0
    %vm128 = vcmask 123904
    %v129 = vsel %vm128, %v125, 0.0
    %130 = vadd.xlane.f32.xlu0 %v129
    %v131 = vpop.xlane.xlu0 %130
    %v132 = vrot.slane %v131, 4
    %v133 = vadd.f32 %v131, %v132
    %v134 = vrot.slane %v133, 2
    %v135 = vadd.f32 %v133, %v134
    %v136 = vrot.slane %v135, 1
    %v137 = vadd.f32 %v135, %v136
    %s138 = vtos %v137
    %v139 = vmul.f32 %v125, 1.6
    %v140 = vstv %s138
    %v141 = vrcp.pop %v140
    %v142 = vmul.f32 %v139, %v141
    %v143 = vmin.f32 %v142, 1.0
    %vm144 = vcmp.lt.f32.partialorder %v34, %v143
    %v145 = vsel %vm144, 1, 0
    %v146 = vcvt.s32.f32 %v145
    %vm147 = vcmask 130048
    %v149 = vsel %vm147, %v146, 0
    %151 = vmatprep.subr.mxu0 0.0
    %152 = vmatpush1.msra.mxu0 0.0
    %153 = vmatprep.subr.mxu0 0.0
    %154 = vmatpush1.msra.mxu0 0.0
    %155 = vmatprep.subr.mxu0 0.0
    %156 = vmatpush1.msra.mxu0 0.0
    %157 = vmatprep.subr.mxu0 0.0
    %158 = vmatpush1.msra.mxu0 0.0
    %159 = vmatprep.subr.mxu0 0.0
    %160 = vmatpush1.msra.mxu0 0.0
    %161 = vmatprep.subr.mxu0 0.0
    %162 = vmatpush1.msra.mxu0 0.0
    %163 = vmatprep.subr.mxu0 0.0
    %164 = vmatpush1.msra.mxu0 0.0
    %165 = vmatprep.subr.mxu0 0.0
    %166 = vmatpush1.msra.mxu0 0.0
    %167 = vmatprep.subr.mxu0 0.0
    %168 = vmatpush1.msra.mxu0 0.0
    %169 = vmatprep.subr.mxu0 0.0
    %170 = vmatpush1.msra.mxu0 0.0
    %171 = vmatprep.subr.mxu0 0.0
    %172 = vmatpush1.msra.mxu0 0.0
    %173 = vmatprep.subr.mxu0 0.0
    %174 = vmatpush1.msra.mxu0 0.0
    %175 = vmatprep.subr.mxu0 0.0
    %176 = vmatpush1.msra.mxu0 0.0
    %177 = vmatprep.subr.mxu0 0.0
    %178 = vmatpush1.msra.mxu0 0.0
    %179 = vmatprep.subr.mxu0 0.0
    %180 = vmatpush1.msra.mxu0 %v36
    %181 = vmatprep.subr.mxu0 0.0
    %182 = vmatpush1.msra.mxu0 %v35
    %183 = vmatprep.subr.mxu0 0.0
    %184 = vmatpush2.msra.mxu0 0.0
    %185 = vmatprep.subr.mxu0 0.0
    %186 = vmatpush2.msra.mxu0 0.0
    %187 = vmatprep.subr.mxu0 0.0
    %188 = vmatpush2.msra.mxu0 0.0
    %189 = vmatprep.subr.mxu0 0.0
    %190 = vmatpush2.msra.mxu0 0.0
    %191 = vmatprep.subr.mxu0 0.0
    %192 = vmatpush2.msra.mxu0 0.0
    %193 = vmatprep.subr.mxu0 0.0
    %194 = vmatpush2.msra.mxu0 0.0
    %195 = vmatprep.subr.mxu0 0.0
    %196 = vmatpush2.msra.mxu0 0.0
    %197 = vmatprep.subr.mxu0 0.0
    %198 = vmatpush2.msra.mxu0 0.0
    %199 = vmatprep.subr.mxu0 0.0
    %200 = vmatpush2.msra.mxu0 0.0
    %201 = vmatprep.subr.mxu0 0.0
    %202 = vmatpush2.msra.mxu0 0.0
    %203 = vmatprep.subr.mxu0 0.0
    %204 = vmatpush2.msra.mxu0 0.0
    %205 = vmatprep.subr.mxu0 0.0
    %206 = vmatpush2.msra.mxu0 0.0
    %207 = vmatprep.subr.mxu0 0.0
    %208 = vmatpush2.msra.mxu0 0.0
    %209 = vmatprep.subr.mxu0 0.0
    %210 = vmatpush2.msra.mxu0 0.0
    %211 = vmatprep.subr.mxu0 0.0
    %212 = vmatpush2.msra.mxu0 0.0
    %213 = vmatprep.subr.mxu0 0.0
    %214 = vmatpush2.msra.mxu0 0.0
    %215 = vmatprep.mubr.f32.mxu0 0.0
    %216 = vmatmul.mubr.f32.gmra.mxu0 %v149
    %v217 = vpop.f32.mrf.mxu0
    %v218 = vadd.f32 0.0, %v217
    %v219 = vpop.f32.mrf.mxu0
    %220 = vdwg.mxu0
    %vm221 = vcmp.gt.f32.partialorder %v218, 0.001
    %v222 = vsel %vm221, 1, 0
    %v223 = vcvt.s32.f32 %v222
    %v224 = vsub.f32 1.0, %v223
    %v225 = vsel %vm128, %v224, 0.0
    %226 = vadd.xlane.f32.xlu0 %v225
    %v227 = vpop.xlane.xlu0 %226
    %v228 = vrot.slane %v227, 4
    %v229 = vadd.f32 %v227, %v228
    %v230 = vrot.slane %v229, 2
    %v231 = vadd.f32 %v229, %v230
    %v232 = vrot.slane %v231, 1
    %v233 = vadd.f32 %v231, %v232
    %s234 = vtos %v233
    %v235 = vstv %s234
    %v236 = vrcp.pop %v235
    %v237 = vmul.f32 32.0, %v236
    %v238 = vmul.f32 %v224, %v237
    %v240 = vsel %vm147, %v238, 0
    %v243 = vsel %vm147, %v37, 0
    %v246 = vsel %vm147, %v38, 0
    %v249 = vsel %vm147, %v39, 0
    %v252 = vsel %vm147, %v40, 0
    %v255 = vsel %vm147, %v41, 0
    %v258 = vsel %vm147, %v42, 0
    %v261 = vsel %vm147, %v43, 0
    %v264 = vsel %vm147, %v44, 0
    %v267 = vsel %vm147, %v45, 0
    %v270 = vsel %vm147, %v46, 0
    %v273 = vsel %vm147, %v47, 0
    %v276 = vsel %vm147, %v48, 0
    %v279 = vsel %vm147, %v49, 0
    %v282 = vsel %vm147, %v50, 0
    %v285 = vsel %vm147, %v51, 0
    %v288 = vsel %vm147, %v52, 0
    %290 = vmatprep.subr.mxu0 0.0
    %291 = vmatpush1.xpose.msra.mxu0 %v288
    %292 = vmatprep.subr.mxu0 0.0
    %293 = vmatpush1.xpose.msra.mxu0 %v285
    %294 = vmatprep.subr.mxu0 0.0
    %295 = vmatpush1.xpose.msra.mxu0 %v282
    %296 = vmatprep.subr.mxu0 0.0
    %297 = vmatpush1.xpose.msra.mxu0 %v279
    %298 = vmatprep.subr.mxu0 0.0
    %299 = vmatpush1.xpose.msra.mxu0 %v276
    %300 = vmatprep.subr.mxu0 0.0
    %301 = vmatpush1.xpose.msra.mxu0 %v273
    %302 = vmatprep.subr.mxu0 0.0
    %303 = vmatpush1.xpose.msra.mxu0 %v270
    %304 = vmatprep.subr.mxu0 0.0
    %305 = vmatpush1.xpose.msra.mxu0 %v267
    %306 = vmatprep.subr.mxu0 0.0
    %307 = vmatpush1.xpose.msra.mxu0 %v264
    %308 = vmatprep.subr.mxu0 0.0
    %309 = vmatpush1.xpose.msra.mxu0 %v261
    %310 = vmatprep.subr.mxu0 0.0
    %311 = vmatpush1.xpose.msra.mxu0 %v258
    %312 = vmatprep.subr.mxu0 0.0
    %313 = vmatpush1.xpose.msra.mxu0 %v255
    %314 = vmatprep.subr.mxu0 0.0
    %315 = vmatpush1.xpose.msra.mxu0 %v252
    %316 = vmatprep.subr.mxu0 0.0
    %317 = vmatpush1.xpose.msra.mxu0 %v249
    %318 = vmatprep.subr.mxu0 0.0
    %319 = vmatpush1.xpose.msra.mxu0 %v246
    %320 = vmatprep.subr.mxu0 0.0
    %321 = vmatpush1.xpose.msra.mxu0 %v243
    %322 = vmatprep.subr.mxu0 0.0
    %323 = vmatpush2.xpose.msra.mxu0 0.0
    %324 = vmatprep.subr.mxu0 0.0
    %325 = vmatpush2.xpose.msra.mxu0 0.0
    %326 = vmatprep.subr.mxu0 0.0
    %327 = vmatpush2.xpose.msra.mxu0 0.0
    %328 = vmatprep.subr.mxu0 0.0
    %329 = vmatpush2.xpose.msra.mxu0 0.0
    %330 = vmatprep.subr.mxu0 0.0
    %331 = vmatpush2.xpose.msra.mxu0 0.0
    %332 = vmatprep.subr.mxu0 0.0
    %333 = vmatpush2.xpose.msra.mxu0 0.0
    %334 = vmatprep.subr.mxu0 0.0
    %335 = vmatpush2.xpose.msra.mxu0 0.0
    %336 = vmatprep.subr.mxu0 0.0
    %337 = vmatpush2.xpose.msra.mxu0 0.0
    %338 = vmatprep.subr.mxu0 0.0
    %339 = vmatpush2.xpose.msra.mxu0 0.0
    %340 = vmatprep.subr.mxu0 0.0
    %341 = vmatpush2.xpose.msra.mxu0 0.0
    %342 = vmatprep.subr.mxu0 0.0
    %343 = vmatpush2.xpose.msra.mxu0 0.0
    %344 = vmatprep.subr.mxu0 0.0
    %345 = vmatpush2.xpose.msra.mxu0 0.0
    %346 = vmatprep.subr.mxu0 0.0
    %347 = vmatpush2.xpose.msra.mxu0 0.0
    %348 = vmatprep.subr.mxu0 0.0
    %349 = vmatpush2.xpose.msra.mxu0 0.0
    %350 = vmatprep.subr.mxu0 0.0
    %351 = vmatpush2.xpose.msra.mxu0 0.0
    %352 = vmatprep.subr.mxu0 0.0
    %353 = vmatpush2.xpose.msra.mxu0 0.0
    %354 = vmatprep.mubr.f32.mxu0 0.0
    %355 = vmatmul.mubr.f32.gmra.mxu0 %v240
    %v356 = vpop.f32.mrf.mxu0
    %v357 = vadd.f32 0.0, %v356
    %v358 = vpop.f32.mrf.mxu0
    %359 = vdwg.mxu0
    %v362 = vunpack.c.l.s4 1966171168
    %v363 = vunpack.c.0.s8 %v362
    %v364 = vlaneseq
    %v365 = vshrl.u32 %v364, 7
    %v366 = vsub.s32 %v363, %v365
    %v367 = vrot.slane %v357, %v366
    %v368 = vcombine.high %v367, %v367
    %v370 = vunpack.c.l.s4 1966171168
    %v371 = vunpack.c.0.s8 %v370
    %v372 = vlaneseq
    %v373 = vshrl.u32 %v372, 7
    %v374 = vsub.s32 %v371, %v373
    %v375 = vrot.slane %v367, %v374
    %v377 = vunpack.c.l.s4 1966171168
    %v378 = vunpack.c.0.s8 %v377
    %v379 = vlaneseq
    %v380 = vshrl.u32 %v379, 7
    %v381 = vsub.s32 %v378, %v380
    %v382 = vrot.slane %v368, %v381
    %v383 = vlaneseq
    %v384 = vshrl.u32 %v383, 7
    %v385 = vsub.s32 0, %v384
    %v386 = vrot.slane %v375, %v385
    %v387 = vlaneseq
    %v388 = vshrl.u32 %v387, 7
    %v389 = vsub.s32 0, %v388
    %v390 = vrot.slane %v382, %v389
    %v393 = vmul.f32 %v18, %v386
    %v394 = vmul.f32 %v19, %v390
    %395 = vst [vmem:[#allocation2] sm:$0xff] %v393
    %396 = vst [vmem:[#allocation2 + $0x8] sm:$0xff] %v394
    // Predicated region
    $region18: #{tpu_custom_call.1} parent=1 // pred_check
      _
    $region19: #{tpu_custom_call.1} parent=1 // pred_check_branch
      %398 = sbr.rel (0) target = $region21
    $region20: #{tpu_custom_call.1} parent=1 // pred_region
      %s400 = ssub.s32 256, 256
      %401 = vsyncadd [#allocation3], %s400
      %s402 = sshll.u32 [#allocation2], 4
      %s403 = int_to_ptr.vmem [resolvable:$true] %s402
      %408 = dma.vmem_to_hbm [thread:$0]  %s403, 256, %s4, [#allocation3], 128, 128, 8
    $region21: #{tpu_custom_call.1} parent=1 // pred_fallthru
      _
    // Predicated region
    $region22: #{tpu_custom_call.1} parent=1 // pred_check
      _
    $region23: #{tpu_custom_call.1} parent=1 // pred_check_branch
      %410 = sbr.rel (0) target = $region25
    $region24: #{tpu_custom_call.1} parent=1 // pred_region
      %411 = dma.done [#allocation3], 256
    $region25: #{tpu_custom_call.1} parent=1 // pred_fallthru
      _
    %412 = vsyncpa [#allocation3], 1

</llo_original>
